<compile_context>
chip_gen: v7x
topology: tpu7x:2x2x1
jax: 0.10.0
libtpu: 0.0.40
codegen_flags: <defaults>
</compile_context>

<pallas_src>
import jax
import jax.numpy as jnp
from jax.experimental import pallas as pl
from jax.experimental.pallas import tpu as pltpu

FS_TCD_THRESH = 0.05  # matches `FS_TCD_thre` in classifier()


def _round_up(x, m):
    return ((x + m - 1) // m) * m


def _pad_rows(x, rows):
    return jnp.pad(x, ((0, rows - x.shape[0]), (0, 0)))


def _pick_tile(n_pad, cap=512):
    # n_pad is a multiple of 128; pick the biggest of (512, 256, 128) <= cap
    # that divides it so the ~0.35us per-grid-step overhead amortizes.
    for t in (512, 256, 128):
        if t <= cap and n_pad % t == 0:
            return t
    return n_pad


# ----------------------------------------------------------------------------
# classifier(): spatial-compatibility fitness kernel (tiled, online count)
# ----------------------------------------------------------------------------
def _classifier_kernel(src_r_ref, tgt_r_ref, src_c_ref, tgt_c_ref, mask_ref,
                       cnt_ref):
    # Accumulator init on the first column tile (reduction axis = last grid axis).
    @pl.when(pl.program_id(1) == 0)
    def _():
        cnt_ref[...] = jnp.zeros_like(cnt_ref)

    def pdist(rows, cols_t):
        # d[i, j] = ||rows[i] - cols[j]||, accumulated per coordinate on the
        # VPU: no 128-lane coordinate padding, no cancellation-prone gram.
        d2 = None
        for k in range(3):
            diff = rows[:, k:k + 1] - cols_t[k:k + 1, :]   # [TR,1]-[1,TC]->[TR,TC]
            sq = diff * diff
            d2 = sq if d2 is None else d2 + sq
        return jnp.sqrt(d2)

    src_d = pdist(src_r_ref[...], src_c_ref[...])          # [TR, TC]
    tgt_d = pdist(tgt_r_ref[...], tgt_c_ref[...])          # [TR, TC]
    compat = jnp.abs(src_d - tgt_d) < FS_TCD_THRESH        # bool [TR, TC]
    # mask_ref is a 0/1 f32 column-validity row vector: one select against it
    # (broadcast over rows) replaces the previous compare + bool-and + select.
    hits = jnp.where(compat, mask_ref[...], 0.0)           # [TR, TC]
    # lane reduce (XLU) instead of a width-1 MXU matvec
    cnt_ref[...] += jnp.sum(hits, axis=-1, keepdims=True)


def classifier_pallas(tgt_keypts, src_keypts, mask, *, max_tile=512):
    """Pallas version of classifier(tgt[None], src[None]) restricted to mask==1."""
    n = src_keypts.shape[0]
    n_pad = _round_up(n, 128)
    tile = _pick_tile(n_pad, cap=max_tile)

    src = _pad_rows(src_keypts.astype(jnp.float32), n_pad)   # [n_pad, 3]
    tgt = _pad_rows(tgt_keypts.astype(jnp.float32), n_pad)   # [n_pad, 3]
    src_t = src.T                                            # [3, n_pad]
    tgt_t = tgt.T                                            # [3, n_pad]
    m_col = jnp.pad(mask.astype(jnp.float32), (0, n_pad - n)).reshape(1, n_pad)

    counts = pl.pallas_call(
        _classifier_kernel,
        out_shape=jax.ShapeDtypeStruct((n_pad, 1), jnp.float32),
        grid=(n_pad // tile, n_pad // tile),
        in_specs=[
            pl.BlockSpec((tile, 3), lambda i, j: (i, 0)),   # src row coords
            pl.BlockSpec((tile, 3), lambda i, j: (i, 0)),   # tgt row coords
            pl.BlockSpec((3, tile), lambda i, j: (0, j)),   # src col coords (T)
            pl.BlockSpec((3, tile), lambda i, j: (0, j)),   # tgt col coords (T)
            pl.BlockSpec((1, tile), lambda i, j: (0, j)),   # column validity mask
        ],
        out_specs=pl.BlockSpec((tile, 1), lambda i, j: (i, 0)),
        compiler_params=pltpu.CompilerParams(
            dimension_semantics=("parallel", "arbitrary")),
    )(src, tgt, src_t, tgt_t, m_col)

    row_valid = m_col.reshape(n_pad) > 0.0
    # TODO(synk): if no correspondence has score > 0 this returns -inf; the
    # PyTorch nonzero-index path would index an empty tensor instead.
    return jnp.max(jnp.where(row_valid, counts[:, 0], -jnp.inf))


# ----------------------------------------------------------------------------
# conf_logits_decoder on ref + src correspondence features (one fused call)
# ----------------------------------------------------------------------------
def _conf_kernel(ref_ref, src_ref, w_ref, b_ref, o_ref):
    w = w_ref[...]            # [K, 1] bf16
    b = b_ref[...]            # [1, 1] f32
    o_ref[:, 0:1] = jnp.dot(ref_ref[...], w,
                            preferred_element_type=jnp.float32) + b
    o_ref[:, 1:2] = jnp.dot(src_ref[...], w,
                            preferred_element_type=jnp.float32) + b


def conf_overlap_pallas(ref_feats, src_feats, w_bf16, b):
    """Returns [M, 2] f32: col 0 = conf(ref_feats), col 1 = conf(src_feats)."""
    m, k = ref_feats.shape
    m_pad = _round_up(m, 128)
    tile = _pick_tile(m_pad)
    refp = _pad_rows(ref_feats, m_pad).astype(jnp.bfloat16)
    srcp = _pad_rows(src_feats, m_pad).astype(jnp.bfloat16)
    b2 = jnp.asarray(b, jnp.float32).reshape(1, 1)

    out = pl.pallas_call(
        _conf_kernel,
        out_shape=jax.ShapeDtypeStruct((m_pad, 2), jnp.float32),
        grid=(m_pad // tile,),
        in_specs=[
            pl.BlockSpec((tile, k), lambda i: (i, 0)),
            pl.BlockSpec((tile, k), lambda i: (i, 0)),
            pl.BlockSpec((k, 1), lambda i: (0, 0)),
            pl.BlockSpec((1, 1), lambda i: (0, 0)),
        ],
        out_specs=pl.BlockSpec((tile, 2), lambda i: (i, 0)),
        compiler_params=pltpu.CompilerParams(dimension_semantics=("parallel",)),
    )(refp, srcp, w_bf16, b2)
    return out[:m]


# ----------------------------------------------------------------------------
# in_proj_m (split weights, no concat) + fc on ref/src — one fused call
# ----------------------------------------------------------------------------
def _fused_proj_kernel(ref_ref, src_ref, wt_ref, wb_ref, pb_ref, fcw_ref, fb_ref,
                       fused_ref, rproj_ref, sproj_ref):
    r = ref_ref[...]          # [tile, D] bf16
    s = src_ref[...]          # [tile, D] bf16
    # in_proj_m(concat([ref, src], -1)) == ref @ W_top + src @ W_bottom + b
    fused_ref[...] = (
        jnp.dot(r, wt_ref[...], preferred_element_type=jnp.float32)
        + jnp.dot(s, wb_ref[...], preferred_element_type=jnp.float32)
        + pb_ref[...]
    )
    fcw = fcw_ref[...]        # [D, H] bf16, shared by ref and src
    fb = fb_ref[...]          # [1, H] f32
    rproj_ref[...] = jnp.dot(r, fcw, preferred_element_type=jnp.float32) + fb
    sproj_ref[...] = jnp.dot(s, fcw, preferred_element_type=jnp.float32) + fb


def fused_proj_pallas(ref_feats, src_feats, w_proj_ref, w_proj_src, proj_b,
                      fc_w, fc_b):
    m, d = ref_feats.shape
    out_dim = w_proj_ref.shape[1]
    hid = fc_w.shape[1]
    m_pad = _round_up(m, 128)
    tile = _pick_tile(m_pad)
    refp = _pad_rows(ref_feats, m_pad).astype(jnp.bfloat16)
    srcp = _pad_rows(src_feats, m_pad).astype(jnp.bfloat16)
    pb = jnp.asarray(proj_b, jnp.float32).reshape(1, out_dim)
    fb = jnp.asarray(fc_b, jnp.float32).reshape(1, hid)

    fused, rproj, sproj = pl.pallas_call(
        _fused_proj_kernel,
        out_shape=(
            jax.ShapeDtypeStruct((m_pad, out_dim), jnp.float32),
            jax.ShapeDtypeStruct((m_pad, hid), jnp.float32),
            jax.ShapeDtypeStruct((m_pad, hid), jnp.float32),
        ),
        grid=(m_pad // tile,),
        in_specs=[
            pl.BlockSpec((tile, d), lambda i: (i, 0)),
            pl.BlockSpec((tile, d), lambda i: (i, 0)),
            pl.BlockSpec((d, out_dim), lambda i: (0, 0)),
            pl.BlockSpec((d, out_dim), lambda i: (0, 0)),
            pl.BlockSpec((1, out_dim), lambda i: (0, 0)),
            pl.BlockSpec((d, hid), lambda i: (0, 0)),
            pl.BlockSpec((1, hid), lambda i: (0, 0)),
        ],
        out_specs=(
            pl.BlockSpec((tile, out_dim), lambda i: (i, 0)),
            pl.BlockSpec((tile, hid), lambda i: (i, 0)),
            pl.BlockSpec((tile, hid), lambda i: (i, 0)),
        ),
        compiler_params=pltpu.CompilerParams(dimension_semantics=("parallel",)),
    )(refp, srcp, w_proj_ref, w_proj_src, pb, fc_w, fb)
    return fused[:m], rproj[:m], sproj[:m]


# ----------------------------------------------------------------------------
# Registration module (eval-mode hot path)
# ----------------------------------------------------------------------------
class RegistrationPallas:
    """Holds the learnable linears of Registration and runs the Pallas hot path."""

    def __init__(self, key, d_embed, output_dim, hidden_dim, classifier_threshold):
        ks = jax.random.split(key, 6)

        def uni(k, shape, fan_in):
            bound = 1.0 / jnp.sqrt(jnp.float32(fan_in))
            return jax.random.uniform(k, shape, jnp.float32, -bound, bound)

        # conf_logits_decoder: Linear(d_embed, 1)
        self.conf_w = uni(ks[0], (d_embed, 1), d_embed)
        self.conf_b = uni(ks[1], (1,), d_embed)
        # in_proj_m: Linear(2 * output_dim, output_dim)
        proj_w = uni(ks[2], (2 * output_dim, output_dim), 2 * output_dim)
        self.proj_b = uni(ks[3], (output_dim,), 2 * output_dim)
        # fc: Linear(output_dim, hidden_dim)
        self.fc_w = uni(ks[4], (output_dim, hidden_dim), output_dim)
        self.fc_b = uni(ks[5], (hidden_dim,), output_dim)
        self.overlap_threshold = classifier_threshold

        # Pre-split in_proj weight (removes the runtime [M, 2*output_dim]
        # concat) and pre-cast the feature-matmul weights to bf16 (f32 acc).
        self.proj_w_ref = proj_w[:output_dim].astype(jnp.bfloat16)
        self.proj_w_src = proj_w[output_dim:].astype(jnp.bfloat16)
        self.conf_w_bf = self.conf_w.astype(jnp.bfloat16)
        self.fc_w_bf = self.fc_w.astype(jnp.bfloat16)

    def __call__(self, data):
        # corr_indices = nonzero(select_corr_scores > 0)  ->  validity mask
        mask = data["select_corr_scores"] > 0.0

        # renew_fitness_one = classifier(ref_corr_points[idx], src_corr_points[idx])
        renew_fitness_one = classifier_pallas(
            data["ref_corr_points"], data["src_corr_points"], mask
        )

        # conf_logits_decoder on ref + src correspondence features (one call)
        overlap = conf_overlap_pallas(
            data["ref_corr_feats"], data["src_corr_feats"],
            self.conf_w_bf, self.conf_b,
        )
        ref_overlap = overlap[:, 0:1]
        src_overlap = overlap[:, 1:2]

        # in_proj_m (split-weight, no concat) + fc on ref/src, one call
        fused, ref_proj, src_proj = fused_proj_pallas(
            data["ref_feats_f"], data["src_feats_f"],
            self.proj_w_ref, self.proj_w_src, self.proj_b,
            self.fc_w_bf, self.fc_b,
        )

        needs_refinement = renew_fitness_one < self.overlap_threshold

        return {
            "renew_fitness_one": renew_fitness_one,
            "ref_overlap": ref_overlap,
            "src_overlap": src_overlap,
            "fused_feats": fused,
            "ref_feats_proj": ref_proj,
            "src_feats_proj": src_proj,
            "needs_refinement": needs_refinement,
        }


if __name__ == "__main__":
    N_CORR = 128     # number of putative correspondences
    M_FEAT = 128     # number of points carrying fine features
    D_EMBED = 64     # cfg.pos_embed.d_embed
    OUT_DIM = 64     # cfg.geotransformer.output_dim
    HIDDEN = 32      # cfg.geotransformer.hidden_dim

    key = jax.random.PRNGKey(0)
    ks = jax.random.split(key, 8)

    ref_corr_points = jax.random.normal(ks[0], (N_CORR, 3), jnp.float32)
    # src is a noisy copy so the compatibility counts are non-trivial
    src_corr_points = ref_corr_points + 0.02 * jax.random.normal(
        ks[1], (N_CORR, 3), jnp.float32
    )
    select_corr_scores = jax.random.uniform(ks[2], (N_CORR,), jnp.float32) - 0.3
    ref_corr_feats = jax.random.normal(ks[3], (M_FEAT, D_EMBED), jnp.float32)
    src_corr_feats = jax.random.normal(ks[4], (M_FEAT, D_EMBED), jnp.float32)
    ref_feats_f = jax.random.normal(ks[5], (M_FEAT, OUT_DIM), jnp.float32)
    src_feats_f = jax.random.normal(ks[6], (M_FEAT, OUT_DIM), jnp.float32)

    model = RegistrationPallas(
        key=jax.random.PRNGKey(42),
        d_embed=D_EMBED,
        output_dim=OUT_DIM,
        hidden_dim=HIDDEN,
        classifier_threshold=5.0,
    )

    data = {
        "ref_corr_points": ref_corr_points,
        "src_corr_points": src_corr_points,
        "select_corr_scores": select_corr_scores,
        "ref_corr_feats": ref_corr_feats,
        "src_corr_feats": src_corr_feats,
        "ref_feats_f": ref_feats_f,
        "src_feats_f": src_feats_f,
    }

    out = model(data)
    out = jax.block_until_ready(out)

    assert out["ref_overlap"].shape == (M_FEAT, 1)
    assert out["src_overlap"].shape == (M_FEAT, 1)
    assert out["fused_feats"].shape == (M_FEAT, OUT_DIM)
    assert out["ref_feats_proj"].shape == (M_FEAT, HIDDEN)
    assert out["src_feats_proj"].shape == (M_FEAT, HIDDEN)
    assert out["renew_fitness_one"].shape == ()
    assert bool(jnp.isfinite(out["renew_fitness_one"]))

    print("KERNEL_OK")
</pallas_src>

<mosaic_0001>
module attributes {stable_mosaic.version = 11 : i64} {
  func.func @_classifier_kernel(%arg0: i32, %arg1: i32, %arg2: memref<128x3xf32, #tpu.memory_space<vmem>>, %arg3: memref<128x3xf32, #tpu.memory_space<vmem>>, %arg4: memref<3x128xf32, #tpu.memory_space<vmem>>, %arg5: memref<3x128xf32, #tpu.memory_space<vmem>>, %arg6: memref<1x128xf32, #tpu.memory_space<vmem>>, %arg7: memref<128x1xf32, #tpu.memory_space<vmem>>) attributes {dimension_semantics = [#tpu.dimension_semantics<parallel>, #tpu.dimension_semantics<arbitrary>], iteration_bounds = array<i64: 1, 1>, scalar_prefetch = 0 : i64, scratch_operands = 0 : i64, tpu.core_type = #tpu.core_type<tc>, window_params = [{transform_indices = @transform_0, window_bounds = array<i64: 128, 3>}, {transform_indices = @transform_1, window_bounds = array<i64: 128, 3>}, {transform_indices = @transform_2, window_bounds = array<i64: 3, 128>}, {transform_indices = @transform_3, window_bounds = array<i64: 3, 128>}, {transform_indices = @transform_4, window_bounds = array<i64: 1, 128>}, {transform_indices = @transform_5, window_bounds = array<i64: 128, 1>}]} {
    %c0_i32 = arith.constant 0 : i32
    %0 = arith.cmpi eq, %arg1, %c0_i32 : i32
    %1 = arith.extui %0 : i1 to i32
    %c0_i32_0 = arith.constant 0 : i32
    %2 = arith.cmpi ne, %1, %c0_i32_0 : i32
    scf.if %2 {
      %cst_16 = arith.constant 0.000000e+00 : f32
      %63 = vector.broadcast %cst_16 : f32 to vector<128x1xf32>
      %c0_17 = arith.constant 0 : index
      %c0_18 = arith.constant 0 : index
      %64 = vector.load %arg7[%c0_17, %c0_18] : memref<128x1xf32, #tpu.memory_space<vmem>>, vector<128x1xf32>
      tpu.vector_store %arg7[%c0_17, %c0_18], %63 {strides = array<i32>} : memref<128x1xf32, #tpu.memory_space<vmem>>, vector<128x1xf32>,
    } else {
    }
    %c0 = arith.constant 0 : index
    %c0_1 = arith.constant 0 : index
    %3 = vector.load %arg2[%c0, %c0_1] : memref<128x3xf32, #tpu.memory_space<vmem>>, vector<128x3xf32>
    %c0_2 = arith.constant 0 : index
    %c0_3 = arith.constant 0 : index
    %4 = vector.load %arg4[%c0_2, %c0_3] : memref<3x128xf32, #tpu.memory_space<vmem>>, vector<3x128xf32>
    %5 = vector.extract_strided_slice %3 {offsets = [0, 0], sizes = [128, 1], strides = [1, 1]} : vector<128x3xf32> to vector<128x1xf32>
    %6 = vector.extract_strided_slice %4 {offsets = [0, 0], sizes = [1, 128], strides = [1, 1]} : vector<3x128xf32> to vector<1x128xf32>
    %7 = vector.broadcast %5 : vector<128x1xf32> to vector<128x128xf32>
    %8 = vector.broadcast %6 : vector<1x128xf32> to vector<128x128xf32>
    %9 = arith.subf %7, %8 : vector<128x128xf32>
    %10 = arith.mulf %9, %9 : vector<128x128xf32>
    %11 = vector.extract_strided_slice %3 {offsets = [0, 1], sizes = [128, 1], strides = [1, 1]} : vector<128x3xf32> to vector<128x1xf32>
    %12 = vector.extract_strided_slice %4 {offsets = [1, 0], sizes = [1, 128], strides = [1, 1]} : vector<3x128xf32> to vector<1x128xf32>
    %13 = vector.broadcast %11 : vector<128x1xf32> to vector<128x128xf32>
    %14 = vector.broadcast %12 : vector<1x128xf32> to vector<128x128xf32>
    %15 = arith.subf %13, %14 : vector<128x128xf32>
    %16 = arith.mulf %15, %15 : vector<128x128xf32>
    %17 = arith.addf %10, %16 : vector<128x128xf32>
    %18 = vector.extract_strided_slice %3 {offsets = [0, 2], sizes = [128, 1], strides = [1, 1]} : vector<128x3xf32> to vector<128x1xf32>
    %19 = vector.extract_strided_slice %4 {offsets = [2, 0], sizes = [1, 128], strides = [1, 1]} : vector<3x128xf32> to vector<1x128xf32>
    %20 = vector.broadcast %18 : vector<128x1xf32> to vector<128x128xf32>
    %21 = vector.broadcast %19 : vector<1x128xf32> to vector<128x128xf32>
    %22 = arith.subf %20, %21 : vector<128x128xf32>
    %23 = arith.mulf %22, %22 : vector<128x128xf32>
    %24 = arith.addf %17, %23 : vector<128x128xf32>
    %25 = math.sqrt %24 : vector<128x128xf32>
    %c0_4 = arith.constant 0 : index
    %c0_5 = arith.constant 0 : index
    %26 = vector.load %arg3[%c0_4, %c0_5] : memref<128x3xf32, #tpu.memory_space<vmem>>, vector<128x3xf32>
    %c0_6 = arith.constant 0 : index
    %c0_7 = arith.constant 0 : index
    %27 = vector.load %arg5[%c0_6, %c0_7] : memref<3x128xf32, #tpu.memory_space<vmem>>, vector<3x128xf32>
    %28 = vector.extract_strided_slice %26 {offsets = [0, 0], sizes = [128, 1], strides = [1, 1]} : vector<128x3xf32> to vector<128x1xf32>
    %29 = vector.extract_strided_slice %27 {offsets = [0, 0], sizes = [1, 128], strides = [1, 1]} : vector<3x128xf32> to vector<1x128xf32>
    %30 = vector.broadcast %28 : vector<128x1xf32> to vector<128x128xf32>
    %31 = vector.broadcast %29 : vector<1x128xf32> to vector<128x128xf32>
    %32 = arith.subf %30, %31 : vector<128x128xf32>
    %33 = arith.mulf %32, %32 : vector<128x128xf32>
    %34 = vector.extract_strided_slice %26 {offsets = [0, 1], sizes = [128, 1], strides = [1, 1]} : vector<128x3xf32> to vector<128x1xf32>
    %35 = vector.extract_strided_slice %27 {offsets = [1, 0], sizes = [1, 128], strides = [1, 1]} : vector<3x128xf32> to vector<1x128xf32>
    %36 = vector.broadcast %34 : vector<128x1xf32> to vector<128x128xf32>
    %37 = vector.broadcast %35 : vector<1x128xf32> to vector<128x128xf32>
    %38 = arith.subf %36, %37 : vector<128x128xf32>
    %39 = arith.mulf %38, %38 : vector<128x128xf32>
    %40 = arith.addf %33, %39 : vector<128x128xf32>
    %41 = vector.extract_strided_slice %26 {offsets = [0, 2], sizes = [128, 1], strides = [1, 1]} : vector<128x3xf32> to vector<128x1xf32>
    %42 = vector.extract_strided_slice %27 {offsets = [2, 0], sizes = [1, 128], strides = [1, 1]} : vector<3x128xf32> to vector<1x128xf32>
    %43 = vector.broadcast %41 : vector<128x1xf32> to vector<128x128xf32>
    %44 = vector.broadcast %42 : vector<1x128xf32> to vector<128x128xf32>
    %45 = arith.subf %43, %44 : vector<128x128xf32>
    %46 = arith.mulf %45, %45 : vector<128x128xf32>
    %47 = arith.addf %40, %46 : vector<128x128xf32>
    %48 = math.sqrt %47 : vector<128x128xf32>
    %49 = arith.subf %25, %48 : vector<128x128xf32>
    %50 = math.absf %49 : vector<128x128xf32>
    %cst = arith.constant 5.000000e-02 : f32
    %51 = vector.broadcast %cst : f32 to vector<128x128xf32>
    %52 = arith.cmpf olt, %50, %51 : vector<128x128xf32>
    %c0_8 = arith.constant 0 : index
    %c0_9 = arith.constant 0 : index
    %53 = vector.load %arg6[%c0_8, %c0_9] : memref<1x128xf32, #tpu.memory_space<vmem>>, vector<1x128xf32>
    %cst_10 = arith.constant 0.000000e+00 : f32
    %54 = vector.shape_cast %53 : vector<1x128xf32> to vector<1x128xf32>
    %55 = vector.broadcast %54 : vector<1x128xf32> to vector<128x128xf32>
    %56 = vector.broadcast %cst_10 : f32 to vector<128x128xf32>
    %57 = arith.select %52, %55, %56 : vector<128x128xi1>, vector<128x128xf32>
    %c0_11 = arith.constant 0 : index
    %c0_12 = arith.constant 0 : index
    %58 = vector.load %arg7[%c0_11, %c0_12] : memref<128x1xf32, #tpu.memory_space<vmem>>, vector<128x1xf32>
    %cst_13 = arith.constant dense<0.000000e+00> : vector<128xf32>
    %59 = vector.multi_reduction <add>, %57, %cst_13 [1] : vector<128x128xf32> to vector<128xf32>
    %60 = vector.shape_cast %59 : vector<128xf32> to vector<128x1xf32>
    %61 = arith.addf %58, %60 : vector<128x1xf32>
    %c0_14 = arith.constant 0 : index
    %c0_15 = arith.constant 0 : index
    %62 = vector.load %arg7[%c0_14, %c0_15] : memref<128x1xf32, #tpu.memory_space<vmem>>, vector<128x1xf32>
    tpu.vector_store %arg7[%c0_14, %c0_15], %61 {strides = array<i32>} : memref<128x1xf32, #tpu.memory_space<vmem>>, vector<128x1xf32>,
    return
  }
  func.func @transform_0(%arg0: i32, %arg1: i32) -> (i32, i32) {
    %c0_i32 = arith.constant 0 : i32
    %c0_i32_0 = arith.constant 0 : i32
    return %arg0, %c0_i32 : i32, i32
  }
  func.func @transform_1(%arg0: i32, %arg1: i32) -> (i32, i32) {
    %c0_i32 = arith.constant 0 : i32
    %c0_i32_0 = arith.constant 0 : i32
    return %arg0, %c0_i32 : i32, i32
  }
  func.func @transform_2(%arg0: i32, %arg1: i32) -> (i32, i32) {
    %c0_i32 = arith.constant 0 : i32
    %c0_i32_0 = arith.constant 0 : i32
    return %c0_i32, %arg1 : i32, i32
  }
  func.func @transform_3(%arg0: i32, %arg1: i32) -> (i32, i32) {
    %c0_i32 = arith.constant 0 : i32
    %c0_i32_0 = arith.constant 0 : i32
    return %c0_i32, %arg1 : i32, i32
  }
  func.func @transform_4(%arg0: i32, %arg1: i32) -> (i32, i32) {
    %c0_i32 = arith.constant 0 : i32
    %c0_i32_0 = arith.constant 0 : i32
    return %c0_i32, %arg1 : i32, i32
  }
  func.func @transform_5(%arg0: i32, %arg1: i32) -> (i32, i32) {
    %c0_i32 = arith.constant 0 : i32
    %c0_i32_0 = arith.constant 0 : i32
    return %arg0, %c0_i32 : i32, i32
  }
}

</mosaic_0001>

<llo_original>
// kernel: tpu_custom_call.1
$region0: #{tpu_custom_call.1}
  #allocation0 [shape = 'u32[]', space=smem, size = 0x4, offset = 0x4, fixed_abs, tag = 'smem constant byte address 0x4 - core index']
  #allocation1 [shape = 'u32[144,128]{1,0:T(1,128)}', space=vmem, size = 0x12000, scoped, tag = 'internal scratch']
  %s0 = inlined_call_operand.vmem [shape: f32[128,3], index: 0, kind: input, shape index: {}]
  %s1 = inlined_call_operand.vmem [shape: f32[128,3], index: 1, kind: input, shape index: {}]
  %s2 = inlined_call_operand.vmem [shape: f32[3,128], index: 2, kind: input, shape index: {}]
  %s3 = inlined_call_operand.vmem [shape: f32[3,128], index: 3, kind: input, shape index: {}]
  %s4 = inlined_call_operand.vmem [shape: f32[1,128], index: 4, kind: input, shape index: {}]
  %s5 = inlined_call_operand.vmem [shape: f32[128,1], index: 5, kind: output, shape index: {}]
  %s6 = sld [smem:[#allocation0]]
  $region34: #{tpu_custom_call.1} parent=0
    _
  %s8 = ssub.s32 1, %s6
  %s9 = scalar_select 0, %s8, %s6
  // Predicated region
  $region2: #{tpu_custom_call.1} parent=0 // pred_check
    _
  $region3: #{tpu_custom_call.1} parent=0 // pred_check_branch
    %11 = sbr.rel (0) target = $region5
  $region4: #{tpu_custom_call.1} parent=0 // pred_region
    _
  $region5: #{tpu_custom_call.1} parent=0 // pred_fallthru
    _
  // Predicated region
  $region6: #{tpu_custom_call.1} parent=0 // pred_check
    _
  $region7: #{tpu_custom_call.1} parent=0 // pred_check_branch
    %13 = sbr.rel (0) target = $region9
  $region8: #{tpu_custom_call.1} parent=0 // pred_region
    _
  $region9: #{tpu_custom_call.1} parent=0 // pred_fallthru
    _
  // Predicated region
  $region10: #{tpu_custom_call.1} parent=0 // pred_check
    _
  $region11: #{tpu_custom_call.1} parent=0 // pred_check_branch
    %15 = sbr.rel (0) target = $region13
  $region12: #{tpu_custom_call.1} parent=0 // pred_region
    _
  $region13: #{tpu_custom_call.1} parent=0 // pred_fallthru
    _
  // Predicated region
  $region14: #{tpu_custom_call.1} parent=0 // pred_check
    _
  $region15: #{tpu_custom_call.1} parent=0 // pred_check_branch
    %17 = sbr.rel (0) target = $region17
  $region16: #{tpu_custom_call.1} parent=0 // pred_region
    _
  $region17: #{tpu_custom_call.1} parent=0 // pred_fallthru
    _
  // Predicated region
  $region18: #{tpu_custom_call.1} parent=0 // pred_check
    _
  $region19: #{tpu_custom_call.1} parent=0 // pred_check_branch
    %19 = sbr.rel (0) target = $region21
  $region20: #{tpu_custom_call.1} parent=0 // pred_region
    _
  $region21: #{tpu_custom_call.1} parent=0 // pred_fallthru
    _
  %p20 = scmp.eq.s32.totalorder 0, 0
  // Predicated region
  $region22: #{tpu_custom_call.1} parent=0 // pred_check
    %p21 = pneg %p20
  $region23: #{tpu_custom_call.1} parent=0 // pred_check_branch
    %23 = sbr.rel (%p21) target = $region25
  $region24: #{tpu_custom_call.1} parent=0 // pred_region
    %vm24 = vcmask 7168
    %25 = vst.msk [vmem:[%s5] sm:$0xff] %vm24, 0.0
    %26 = vst.msk [vmem:[%s5 + $0x8] sm:$0xff] %vm24, 0.0
    %27 = vst.msk [vmem:[%s5 + $0x10] sm:$0xff] %vm24, 0.0
    %28 = vst.msk [vmem:[%s5 + $0x18] sm:$0xff] %vm24, 0.0
    %29 = vst.msk [vmem:[%s5 + $0x20] sm:$0xff] %vm24, 0.0
    %30 = vst.msk [vmem:[%s5 + $0x28] sm:$0xff] %vm24, 0.0
    %31 = vst.msk [vmem:[%s5 + $0x30] sm:$0xff] %vm24, 0.0
    %32 = vst.msk [vmem:[%s5 + $0x38] sm:$0xff] %vm24, 0.0
    %33 = vst.msk [vmem:[%s5 + $0x40] sm:$0xff] %vm24, 0.0
    %34 = vst.msk [vmem:[%s5 + $0x48] sm:$0xff] %vm24, 0.0
    %35 = vst.msk [vmem:[%s5 + $0x50] sm:$0xff] %vm24, 0.0
    %36 = vst.msk [vmem:[%s5 + $0x58] sm:$0xff] %vm24, 0.0
    %37 = vst.msk [vmem:[%s5 + $0x60] sm:$0xff] %vm24, 0.0
    %38 = vst.msk [vmem:[%s5 + $0x68] sm:$0xff] %vm24, 0.0
    %39 = vst.msk [vmem:[%s5 + $0x70] sm:$0xff] %vm24, 0.0
    %40 = vst.msk [vmem:[%s5 + $0x78] sm:$0xff] %vm24, 0.0
  $region25: #{tpu_custom_call.1} parent=0 // pred_fallthru
    _
  %v41 = vld [vmem:[%s0] sm:$0xff]
  %v42 = vld [vmem:[%s0 + $0x8] sm:$0xff]
  %v43 = vld [vmem:[%s0 + $0x10] sm:$0xff]
  %v44 = vld [vmem:[%s0 + $0x18] sm:$0xff]
  %v45 = vld [vmem:[%s0 + $0x20] sm:$0xff]
  %v46 = vld [vmem:[%s0 + $0x28] sm:$0xff]
  %v47 = vld [vmem:[%s0 + $0x30] sm:$0xff]
  %v48 = vld [vmem:[%s0 + $0x38] sm:$0xff]
  %v49 = vld [vmem:[%s0 + $0x40] sm:$0xff]
  %v50 = vld [vmem:[%s0 + $0x48] sm:$0xff]
  %v51 = vld [vmem:[%s0 + $0x50] sm:$0xff]
  %v52 = vld [vmem:[%s0 + $0x58] sm:$0xff]
  %v53 = vld [vmem:[%s0 + $0x60] sm:$0xff]
  %v54 = vld [vmem:[%s0 + $0x68] sm:$0xff]
  %v55 = vld [vmem:[%s0 + $0x70] sm:$0xff]
  %v56 = vld [vmem:[%s0 + $0x78] sm:$0xff]
  %v57 = vld [vmem:[%s2] sm:$0x7]
  %59 = vset.pattern.permute.xlu0 0
  %60 = vperm.xlu0 %59, %v41
  %v61 = vpop.permute.xlu0 %60
  %64 = vset.pattern.permute.xlu0 0
  %65 = vperm.xlu0 %64, %v42
  %v66 = vpop.permute.xlu0 %65
  %69 = vset.pattern.permute.xlu0 0
  %70 = vperm.xlu0 %69, %v43
  %v71 = vpop.permute.xlu0 %70
  %74 = vset.pattern.permute.xlu0 0
  %75 = vperm.xlu0 %74, %v44
  %v76 = vpop.permute.xlu0 %75
  %79 = vset.pattern.permute.xlu0 0
  %80 = vperm.xlu0 %79, %v45
  %v81 = vpop.permute.xlu0 %80
  %84 = vset.pattern.permute.xlu0 0
  %85 = vperm.xlu0 %84, %v46
  %v86 = vpop.permute.xlu0 %85
  %89 = vset.pattern.permute.xlu0 0
  %90 = vperm.xlu0 %89, %v47
  %v91 = vpop.permute.xlu0 %90
  %94 = vset.pattern.permute.xlu0 0
  %95 = vperm.xlu0 %94, %v48
  %v96 = vpop.permute.xlu0 %95
  %99 = vset.pattern.permute.xlu0 0
  %100 = vperm.xlu0 %99, %v49
  %v101 = vpop.permute.xlu0 %100
  %104 = vset.pattern.permute.xlu0 0
  %105 = vperm.xlu0 %104, %v50
  %v106 = vpop.permute.xlu0 %105
  %109 = vset.pattern.permute.xlu0 0
  %110 = vperm.xlu0 %109, %v51
  %v111 = vpop.permute.xlu0 %110
  %114 = vset.pattern.permute.xlu0 0
  %115 = vperm.xlu0 %114, %v52
  %v116 = vpop.permute.xlu0 %115
  %119 = vset.pattern.permute.xlu0 0
  %120 = vperm.xlu0 %119, %v53
  %v121 = vpop.permute.xlu0 %120
  %124 = vset.pattern.permute.xlu0 0
  %125 = vperm.xlu0 %124, %v54
  %v126 = vpop.permute.xlu0 %125
  %129 = vset.pattern.permute.xlu0 0
  %130 = vperm.xlu0 %129, %v55
  %v131 = vpop.permute.xlu0 %130
  %134 = vset.pattern.permute.xlu0 0
  %135 = vperm.xlu0 %134, %v56
  %v136 = vpop.permute.xlu0 %135
  %v138 = vlaneseq
  %v139 = vshrl.u32 %v138, 7
  %v140 = vsub.s32 0, %v139
  %v141 = vrot.slane %v57, %v140
  %v142 = vsub.f32 %v61, %v141
  %v143 = vsub.f32 %v66, %v141
  %v144 = vsub.f32 %v71, %v141
  %v145 = vsub.f32 %v76, %v141
  %v146 = vsub.f32 %v81, %v141
  %v147 = vsub.f32 %v86, %v141
  %v148 = vsub.f32 %v91, %v141
  %v149 = vsub.f32 %v96, %v141
  %v150 = vsub.f32 %v101, %v141
  %v151 = vsub.f32 %v106, %v141
  %v152 = vsub.f32 %v111, %v141
  %v153 = vsub.f32 %v116, %v141
  %v154 = vsub.f32 %v121, %v141
  %v155 = vsub.f32 %v126, %v141
  %v156 = vsub.f32 %v131, %v141
  %v157 = vsub.f32 %v136, %v141
  %v158 = vmul.f32 %v142, %v142
  %v159 = vmul.f32 %v143, %v143
  %v160 = vmul.f32 %v144, %v144
  %v161 = vmul.f32 %v145, %v145
  %v162 = vmul.f32 %v146, %v146
  %v163 = vmul.f32 %v147, %v147
  %v164 = vmul.f32 %v148, %v148
  %v165 = vmul.f32 %v149, %v149
  %v166 = vmul.f32 %v150, %v150
  %v167 = vmul.f32 %v151, %v151
  %v168 = vmul.f32 %v152, %v152
  %v169 = vmul.f32 %v153, %v153
  %v170 = vmul.f32 %v154, %v154
  %v171 = vmul.f32 %v155, %v155
  %v172 = vmul.f32 %v156, %v156
  %v173 = vmul.f32 %v157, %v157
  %174 = vset.pattern.permute.xlu0 1
  %175 = vperm.xlu0 %174, %v41
  %v176 = vpop.permute.xlu0 %175
  %178 = vset.pattern.permute.xlu0 1
  %179 = vperm.xlu0 %178, %v42
  %v180 = vpop.permute.xlu0 %179
  %182 = vset.pattern.permute.xlu0 1
  %183 = vperm.xlu0 %182, %v43
  %v184 = vpop.permute.xlu0 %183
  %186 = vset.pattern.permute.xlu0 1
  %187 = vperm.xlu0 %186, %v44
  %v188 = vpop.permute.xlu0 %187
  %190 = vset.pattern.permute.xlu0 1
  %191 = vperm.xlu0 %190, %v45
  %v192 = vpop.permute.xlu0 %191
  %194 = vset.pattern.permute.xlu0 1
  %195 = vperm.xlu0 %194, %v46
  %v196 = vpop.permute.xlu0 %195
  %198 = vset.pattern.permute.xlu0 1
  %199 = vperm.xlu0 %198, %v47
  %v200 = vpop.permute.xlu0 %199
  %202 = vset.pattern.permute.xlu0 1
  %203 = vperm.xlu0 %202, %v48
  %v204 = vpop.permute.xlu0 %203
  %206 = vset.pattern.permute.xlu0 1
  %207 = vperm.xlu0 %206, %v49
  %v208 = vpop.permute.xlu0 %207
  %210 = vset.pattern.permute.xlu0 1
  %211 = vperm.xlu0 %210, %v50
  %v212 = vpop.permute.xlu0 %211
  %214 = vset.pattern.permute.xlu0 1
  %215 = vperm.xlu0 %214, %v51
  %v216 = vpop.permute.xlu0 %215
  %218 = vset.pattern.permute.xlu0 1
  %219 = vperm.xlu0 %218, %v52
  %v220 = vpop.permute.xlu0 %219
  %222 = vset.pattern.permute.xlu0 1
  %223 = vperm.xlu0 %222, %v53
  %v224 = vpop.permute.xlu0 %223
  %226 = vset.pattern.permute.xlu0 1
  %227 = vperm.xlu0 %226, %v54
  %v228 = vpop.permute.xlu0 %227
  %230 = vset.pattern.permute.xlu0 1
  %231 = vperm.xlu0 %230, %v55
  %v232 = vpop.permute.xlu0 %231
  %234 = vset.pattern.permute.xlu0 1
  %235 = vperm.xlu0 %234, %v56
  %v236 = vpop.permute.xlu0 %235
  %v238 = vlaneseq
  %v239 = vshrl.u32 %v238, 7
  %v240 = vsub.s32 1, %v239
  %v241 = vrot.slane %v57, %v240
  %v242 = vsub.f32 %v176, %v241
  %v243 = vsub.f32 %v180, %v241
  %v244 = vsub.f32 %v184, %v241
  %v245 = vsub.f32 %v188, %v241
  %v246 = vsub.f32 %v192, %v241
  %v247 = vsub.f32 %v196, %v241
  %v248 = vsub.f32 %v200, %v241
  %v249 = vsub.f32 %v204, %v241
  %v250 = vsub.f32 %v208, %v241
  %v251 = vsub.f32 %v212, %v241
  %v252 = vsub.f32 %v216, %v241
  %v253 = vsub.f32 %v220, %v241
  %v254 = vsub.f32 %v224, %v241
  %v255 = vsub.f32 %v228, %v241
  %v256 = vsub.f32 %v232, %v241
  %v257 = vsub.f32 %v236, %v241
  %v258 = vmul.f32 %v242, %v242
  %v259 = vmul.f32 %v243, %v243
  %v260 = vmul.f32 %v244, %v244
  %v261 = vmul.f32 %v245, %v245
  %v262 = vmul.f32 %v246, %v246
  %v263 = vmul.f32 %v247, %v247
  %v264 = vmul.f32 %v248, %v248
  %v265 = vmul.f32 %v249, %v249
  %v266 = vmul.f32 %v250, %v250
  %v267 = vmul.f32 %v251, %v251
  %v268 = vmul.f32 %v252, %v252
  %v269 = vmul.f32 %v253, %v253
  %v270 = vmul.f32 %v254, %v254
  %v271 = vmul.f32 %v255, %v255
  %v272 = vmul.f32 %v256, %v256
  %v273 = vmul.f32 %v257, %v257
  %v274 = vadd.f32 %v158, %v258
  %v275 = vadd.f32 %v159, %v259
  %v276 = vadd.f32 %v160, %v260
  %v277 = vadd.f32 %v161, %v261
  %v278 = vadd.f32 %v162, %v262
  %v279 = vadd.f32 %v163, %v263
  %v280 = vadd.f32 %v164, %v264
  %v281 = vadd.f32 %v165, %v265
  %v282 = vadd.f32 %v166, %v266
  %v283 = vadd.f32 %v167, %v267
  %v284 = vadd.f32 %v168, %v268
  %v285 = vadd.f32 %v169, %v269
  %v286 = vadd.f32 %v170, %v270
  %v287 = vadd.f32 %v171, %v271
  %v288 = vadd.f32 %v172, %v272
  %v289 = vadd.f32 %v173, %v273
  %290 = vset.pattern.permute.xlu0 2
  %291 = vperm.xlu0 %290, %v41
  %v292 = vpop.permute.xlu0 %291
  %294 = vset.pattern.permute.xlu0 2
  %295 = vperm.xlu0 %294, %v42
  %v296 = vpop.permute.xlu0 %295
  %298 = vset.pattern.permute.xlu0 2
  %299 = vperm.xlu0 %298, %v43
  %v300 = vpop.permute.xlu0 %299
  %302 = vset.pattern.permute.xlu0 2
  %303 = vperm.xlu0 %302, %v44
  %v304 = vpop.permute.xlu0 %303
  %306 = vset.pattern.permute.xlu0 2
  %307 = vperm.xlu0 %306, %v45
  %v308 = vpop.permute.xlu0 %307
  %310 = vset.pattern.permute.xlu0 2
  %311 = vperm.xlu0 %310, %v46
  %v312 = vpop.permute.xlu0 %311
  %314 = vset.pattern.permute.xlu0 2
  %315 = vperm.xlu0 %314, %v47
  %v316 = vpop.permute.xlu0 %315
  %318 = vset.pattern.permute.xlu0 2
  %319 = vperm.xlu0 %318, %v48
  %v320 = vpop.permute.xlu0 %319
  %322 = vset.pattern.permute.xlu0 2
  %323 = vperm.xlu0 %322, %v49
  %v324 = vpop.permute.xlu0 %323
  %326 = vset.pattern.permute.xlu0 2
  %327 = vperm.xlu0 %326, %v50
  %v328 = vpop.permute.xlu0 %327
  %330 = vset.pattern.permute.xlu0 2
  %331 = vperm.xlu0 %330, %v51
  %v332 = vpop.permute.xlu0 %331
  %334 = vset.pattern.permute.xlu0 2
  %335 = vperm.xlu0 %334, %v52
  %v336 = vpop.permute.xlu0 %335
  %338 = vset.pattern.permute.xlu0 2
  %339 = vperm.xlu0 %338, %v53
  %v340 = vpop.permute.xlu0 %339
  %342 = vset.pattern.permute.xlu0 2
  %343 = vperm.xlu0 %342, %v54
  %v344 = vpop.permute.xlu0 %343
  %346 = vset.pattern.permute.xlu0 2
  %347 = vperm.xlu0 %346, %v55
  %v348 = vpop.permute.xlu0 %347
  %350 = vset.pattern.permute.xlu0 2
  %351 = vperm.xlu0 %350, %v56
  %v352 = vpop.permute.xlu0 %351
  %v354 = vlaneseq
  %v355 = vshrl.u32 %v354, 7
  %v356 = vsub.s32 2, %v355
  %v357 = vrot.slane %v57, %v356
  %v358 = vsub.f32 %v292, %v357
  %v359 = vsub.f32 %v296, %v357
  %v360 = vsub.f32 %v300, %v357
  %v361 = vsub.f32 %v304, %v357
  %v362 = vsub.f32 %v308, %v357
  %v363 = vsub.f32 %v312, %v357
  %v364 = vsub.f32 %v316, %v357
  %v365 = vsub.f32 %v320, %v357
  %v366 = vsub.f32 %v324, %v357
  %v367 = vsub.f32 %v328, %v357
  %v368 = vsub.f32 %v332, %v357
  %v369 = vsub.f32 %v336, %v357
  %v370 = vsub.f32 %v340, %v357
  %v371 = vsub.f32 %v344, %v357
  %v372 = vsub.f32 %v348, %v357
  %v373 = vsub.f32 %v352, %v357
  %v374 = vmul.f32 %v358, %v358
  %v375 = vmul.f32 %v359, %v359
  %v376 = vmul.f32 %v360, %v360
  %v377 = vmul.f32 %v361, %v361
  %v378 = vmul.f32 %v362, %v362
  %v379 = vmul.f32 %v363, %v363
  %v380 = vmul.f32 %v364, %v364
  %v381 = vmul.f32 %v365, %v365
  %v382 = vmul.f32 %v366, %v366
  %v383 = vmul.f32 %v367, %v367
  %v384 = vmul.f32 %v368, %v368
  %v385 = vmul.f32 %v369, %v369
  %v386 = vmul.f32 %v370, %v370
  %v387 = vmul.f32 %v371, %v371
  %v388 = vmul.f32 %v372, %v372
  %v389 = vmul.f32 %v373, %v373
  %v390 = vadd.f32 %v274, %v374
  %v391 = vadd.f32 %v275, %v375
  %v392 = vadd.f32 %v276, %v376
  %v393 = vadd.f32 %v277, %v377
  %v394 = vadd.f32 %v278, %v378
  %v395 = vadd.f32 %v279, %v379
  %v396 = vadd.f32 %v280, %v380
  %v397 = vadd.f32 %v281, %v381
  %v398 = vadd.f32 %v282, %v382
  %v399 = vadd.f32 %v283, %v383
  %v400 = vadd.f32 %v284, %v384
  %v401 = vadd.f32 %v285, %v385
  %v402 = vadd.f32 %v286, %v386
  %v403 = vadd.f32 %v287, %v387
  %v404 = vadd.f32 %v288, %v388
  %v405 = vadd.f32 %v289, %v389
  %v406 = vrsqrt.pop %v390
  %v407 = vmul.f32 %v390, %v406
  %vm408 = vcmp.eq.f32.partialorder %v390, inf
  %v409 = vsel %vm408, %v390, %v407
  %vm410 = vcmp.eq.f32.partialorder %v390, 0.0
  %v411 = vand.u32 %v390, 2147483648
  %v412 = vsel %vm410, %v411, %v409
  %v413 = vrsqrt.pop %v391
  %v414 = vmul.f32 %v391, %v413
  %vm415 = vcmp.eq.f32.partialorder %v391, inf
  %v416 = vsel %vm415, %v391, %v414
  %vm417 = vcmp.eq.f32.partialorder %v391, 0.0
  %v418 = vand.u32 %v391, 2147483648
  %v419 = vsel %vm417, %v418, %v416
  %v420 = vrsqrt.pop %v392
  %v421 = vmul.f32 %v392, %v420
  %vm422 = vcmp.eq.f32.partialorder %v392, inf
  %v423 = vsel %vm422, %v392, %v421
  %vm424 = vcmp.eq.f32.partialorder %v392, 0.0
  %v425 = vand.u32 %v392, 2147483648
  %v426 = vsel %vm424, %v425, %v423
  %v427 = vrsqrt.pop %v393
  %v428 = vmul.f32 %v393, %v427
  %vm429 = vcmp.eq.f32.partialorder %v393, inf
  %v430 = vsel %vm429, %v393, %v428
  %vm431 = vcmp.eq.f32.partialorder %v393, 0.0
  %v432 = vand.u32 %v393, 2147483648
  %v433 = vsel %vm431, %v432, %v430
  %v434 = vrsqrt.pop %v394
  %v435 = vmul.f32 %v394, %v434
  %vm436 = vcmp.eq.f32.partialorder %v394, inf
  %v437 = vsel %vm436, %v394, %v435
  %vm438 = vcmp.eq.f32.partialorder %v394, 0.0
  %v439 = vand.u32 %v394, 2147483648
  %v440 = vsel %vm438, %v439, %v437
  %v441 = vrsqrt.pop %v395
  %v442 = vmul.f32 %v395, %v441
  %vm443 = vcmp.eq.f32.partialorder %v395, inf
  %v444 = vsel %vm443, %v395, %v442
  %vm445 = vcmp.eq.f32.partialorder %v395, 0.0
  %v446 = vand.u32 %v395, 2147483648
  %v447 = vsel %vm445, %v446, %v444
  %v448 = vrsqrt.pop %v396
  %v449 = vmul.f32 %v396, %v448
  %vm450 = vcmp.eq.f32.partialorder %v396, inf
  %v451 = vsel %vm450, %v396, %v449
  %vm452 = vcmp.eq.f32.partialorder %v396, 0.0
  %v453 = vand.u32 %v396, 2147483648
  %v454 = vsel %vm452, %v453, %v451
  %v455 = vrsqrt.pop %v397
  %v456 = vmul.f32 %v397, %v455
  %vm457 = vcmp.eq.f32.partialorder %v397, inf
  %v458 = vsel %vm457, %v397, %v456
  %vm459 = vcmp.eq.f32.partialorder %v397, 0.0
  %v460 = vand.u32 %v397, 2147483648
  %v461 = vsel %vm459, %v460, %v458
  %v462 = vrsqrt.pop %v398
  %v463 = vmul.f32 %v398, %v462
  %vm464 = vcmp.eq.f32.partialorder %v398, inf
  %v465 = vsel %vm464, %v398, %v463
  %vm466 = vcmp.eq.f32.partialorder %v398, 0.0
  %v467 = vand.u32 %v398, 2147483648
  %v468 = vsel %vm466, %v467, %v465
  %v469 = vrsqrt.pop %v399
  %v470 = vmul.f32 %v399, %v469
  %vm471 = vcmp.eq.f32.partialorder %v399, inf
  %v472 = vsel %vm471, %v399, %v470
  %vm473 = vcmp.eq.f32.partialorder %v399, 0.0
  %v474 = vand.u32 %v399, 2147483648
  %v475 = vsel %vm473, %v474, %v472
  %v476 = vrsqrt.pop %v400
  %v477 = vmul.f32 %v400, %v476
  %vm478 = vcmp.eq.f32.partialorder %v400, inf
  %v479 = vsel %vm478, %v400, %v477
  %vm480 = vcmp.eq.f32.partialorder %v400, 0.0
  %v481 = vand.u32 %v400, 2147483648
  %v482 = vsel %vm480, %v481, %v479
  %v483 = vrsqrt.pop %v401
  %v484 = vmul.f32 %v401, %v483
  %vm485 = vcmp.eq.f32.partialorder %v401, inf
  %v486 = vsel %vm485, %v401, %v484
  %vm487 = vcmp.eq.f32.partialorder %v401, 0.0
  %v488 = vand.u32 %v401, 2147483648
  %v489 = vsel %vm487, %v488, %v486
  %v490 = vrsqrt.pop %v402
  %v491 = vmul.f32 %v402, %v490
  %vm492 = vcmp.eq.f32.partialorder %v402, inf
  %v493 = vsel %vm492, %v402, %v491
  %vm494 = vcmp.eq.f32.partialorder %v402, 0.0
  %v495 = vand.u32 %v402, 2147483648
  %v496 = vsel %vm494, %v495, %v493
  %v497 = vrsqrt.pop %v403
  %v498 = vmul.f32 %v403, %v497
  %vm499 = vcmp.eq.f32.partialorder %v403, inf
  %v500 = vsel %vm499, %v403, %v498
  %vm501 = vcmp.eq.f32.partialorder %v403, 0.0
  %v502 = vand.u32 %v403, 2147483648
  %v503 = vsel %vm501, %v502, %v500
  %v504 = vrsqrt.pop %v404
  %v505 = vmul.f32 %v404, %v504
  %vm506 = vcmp.eq.f32.partialorder %v404, inf
  %v507 = vsel %vm506, %v404, %v505
  %vm508 = vcmp.eq.f32.partialorder %v404, 0.0
  %v509 = vand.u32 %v404, 2147483648
  %v510 = vsel %vm508, %v509, %v507
  %v511 = vrsqrt.pop %v405
  %v512 = vmul.f32 %v405, %v511
  %vm513 = vcmp.eq.f32.partialorder %v405, inf
  %v514 = vsel %vm513, %v405, %v512
  %vm515 = vcmp.eq.f32.partialorder %v405, 0.0
  %v516 = vand.u32 %v405, 2147483648
  %v517 = vsel %vm515, %v516, %v514
  %v518 = vld [vmem:[%s1] sm:$0xff]
  %v519 = vld [vmem:[%s1 + $0x8] sm:$0xff]
  %v520 = vld [vmem:[%s1 + $0x10] sm:$0xff]
  %v521 = vld [vmem:[%s1 + $0x18] sm:$0xff]
  %v522 = vld [vmem:[%s1 + $0x20] sm:$0xff]
  %v523 = vld [vmem:[%s1 + $0x28] sm:$0xff]
  %v524 = vld [vmem:[%s1 + $0x30] sm:$0xff]
  %v525 = vld [vmem:[%s1 + $0x38] sm:$0xff]
  %v526 = vld [vmem:[%s1 + $0x40] sm:$0xff]
  %v527 = vld [vmem:[%s1 + $0x48] sm:$0xff]
  %v528 = vld [vmem:[%s1 + $0x50] sm:$0xff]
  %v529 = vld [vmem:[%s1 + $0x58] sm:$0xff]
  %v530 = vld [vmem:[%s1 + $0x60] sm:$0xff]
  %v531 = vld [vmem:[%s1 + $0x68] sm:$0xff]
  %v532 = vld [vmem:[%s1 + $0x70] sm:$0xff]
  %v533 = vld [vmem:[%s1 + $0x78] sm:$0xff]
  %v534 = vld [vmem:[%s3] sm:$0x7]
  %536 = vset.pattern.permute.xlu0 0
  %537 = vperm.xlu0 %536, %v518
  %v538 = vpop.permute.xlu0 %537
  %541 = vset.pattern.permute.xlu0 0
  %542 = vperm.xlu0 %541, %v519
  %v543 = vpop.permute.xlu0 %542
  %546 = vset.pattern.permute.xlu0 0
  %547 = vperm.xlu0 %546, %v520
  %v548 = vpop.permute.xlu0 %547
  %551 = vset.pattern.permute.xlu0 0
  %552 = vperm.xlu0 %551, %v521
  %v553 = vpop.permute.xlu0 %552
  %556 = vset.pattern.permute.xlu0 0
  %557 = vperm.xlu0 %556, %v522
  %v558 = vpop.permute.xlu0 %557
  %561 = vset.pattern.permute.xlu0 0
  %562 = vperm.xlu0 %561, %v523
  %v563 = vpop.permute.xlu0 %562
  %566 = vset.pattern.permute.xlu0 0
  %567 = vperm.xlu0 %566, %v524
  %v568 = vpop.permute.xlu0 %567
  %571 = vset.pattern.permute.xlu0 0
  %572 = vperm.xlu0 %571, %v525
  %v573 = vpop.permute.xlu0 %572
  %576 = vset.pattern.permute.xlu0 0
  %577 = vperm.xlu0 %576, %v526
  %v578 = vpop.permute.xlu0 %577
  %581 = vset.pattern.permute.xlu0 0
  %582 = vperm.xlu0 %581, %v527
  %v583 = vpop.permute.xlu0 %582
  %586 = vset.pattern.permute.xlu0 0
  %587 = vperm.xlu0 %586, %v528
  %v588 = vpop.permute.xlu0 %587
  %591 = vset.pattern.permute.xlu0 0
  %592 = vperm.xlu0 %591, %v529
  %v593 = vpop.permute.xlu0 %592
  %596 = vset.pattern.permute.xlu0 0
  %597 = vperm.xlu0 %596, %v530
  %v598 = vpop.permute.xlu0 %597
  %601 = vset.pattern.permute.xlu0 0
  %602 = vperm.xlu0 %601, %v531
  %v603 = vpop.permute.xlu0 %602
  %606 = vset.pattern.permute.xlu0 0
  %607 = vperm.xlu0 %606, %v532
  %v608 = vpop.permute.xlu0 %607
  %611 = vset.pattern.permute.xlu0 0
  %612 = vperm.xlu0 %611, %v533
  %v613 = vpop.permute.xlu0 %612
  %v615 = vlaneseq
  %v616 = vshrl.u32 %v615, 7
  %v617 = vsub.s32 0, %v616
  %v618 = vrot.slane %v534, %v617
  %v619 = vsub.f32 %v538, %v618
  %v620 = vsub.f32 %v543, %v618
  %v621 = vsub.f32 %v548, %v618
  %v622 = vsub.f32 %v553, %v618
  %v623 = vsub.f32 %v558, %v618
  %v624 = vsub.f32 %v563, %v618
  %v625 = vsub.f32 %v568, %v618
  %v626 = vsub.f32 %v573, %v618
  %v627 = vsub.f32 %v578, %v618
  %v628 = vsub.f32 %v583, %v618
  %v629 = vsub.f32 %v588, %v618
  %v630 = vsub.f32 %v593, %v618
  %v631 = vsub.f32 %v598, %v618
  %v632 = vsub.f32 %v603, %v618
  %v633 = vsub.f32 %v608, %v618
  %v634 = vsub.f32 %v613, %v618
  %v635 = vmul.f32 %v619, %v619
  %v636 = vmul.f32 %v620, %v620
  %v637 = vmul.f32 %v621, %v621
  %v638 = vmul.f32 %v622, %v622
  %v639 = vmul.f32 %v623, %v623
  %v640 = vmul.f32 %v624, %v624
  %v641 = vmul.f32 %v625, %v625
  %v642 = vmul.f32 %v626, %v626
  %v643 = vmul.f32 %v627, %v627
  %v644 = vmul.f32 %v628, %v628
  %v645 = vmul.f32 %v629, %v629
  %v646 = vmul.f32 %v630, %v630
  %v647 = vmul.f32 %v631, %v631
  %v648 = vmul.f32 %v632, %v632
  %v649 = vmul.f32 %v633, %v633
  %v650 = vmul.f32 %v634, %v634
  %651 = vset.pattern.permute.xlu0 1
  %652 = vperm.xlu0 %651, %v518
  %v653 = vpop.permute.xlu0 %652
  %655 = vset.pattern.permute.xlu0 1
  %656 = vperm.xlu0 %655, %v519
  %v657 = vpop.permute.xlu0 %656
  %659 = vset.pattern.permute.xlu0 1
  %660 = vperm.xlu0 %659, %v520
  %v661 = vpop.permute.xlu0 %660
  %663 = vset.pattern.permute.xlu0 1
  %664 = vperm.xlu0 %663, %v521
  %v665 = vpop.permute.xlu0 %664
  %667 = vset.pattern.permute.xlu0 1
  %668 = vperm.xlu0 %667, %v522
  %v669 = vpop.permute.xlu0 %668
  %671 = vset.pattern.permute.xlu0 1
  %672 = vperm.xlu0 %671, %v523
  %v673 = vpop.permute.xlu0 %672
  %675 = vset.pattern.permute.xlu0 1
  %676 = vperm.xlu0 %675, %v524
  %v677 = vpop.permute.xlu0 %676
  %679 = vset.pattern.permute.xlu0 1
  %680 = vperm.xlu0 %679, %v525
  %v681 = vpop.permute.xlu0 %680
  %683 = vset.pattern.permute.xlu0 1
  %684 = vperm.xlu0 %683, %v526
  %v685 = vpop.permute.xlu0 %684
  %687 = vset.pattern.permute.xlu0 1
  %688 = vperm.xlu0 %687, %v527
  %v689 = vpop.permute.xlu0 %688
  %691 = vset.pattern.permute.xlu0 1
  %692 = vperm.xlu0 %691, %v528
  %v693 = vpop.permute.xlu0 %692
  %695 = vset.pattern.permute.xlu0 1
  %696 = vperm.xlu0 %695, %v529
  %v697 = vpop.permute.xlu0 %696
  %699 = vset.pattern.permute.xlu0 1
  %700 = vperm.xlu0 %699, %v530
  %v701 = vpop.permute.xlu0 %700
  %703 = vset.pattern.permute.xlu0 1
  %704 = vperm.xlu0 %703, %v531
  %v705 = vpop.permute.xlu0 %704
  %707 = vset.pattern.permute.xlu0 1
  %708 = vperm.xlu0 %707, %v532
  %v709 = vpop.permute.xlu0 %708
  %711 = vset.pattern.permute.xlu0 1
  %712 = vperm.xlu0 %711, %v533
  %v713 = vpop.permute.xlu0 %712
  %v715 = vlaneseq
  %v716 = vshrl.u32 %v715, 7
  %v717 = vsub.s32 1, %v716
  %v718 = vrot.slane %v534, %v717
  %v719 = vsub.f32 %v653, %v718
  %v720 = vsub.f32 %v657, %v718
  %v721 = vsub.f32 %v661, %v718
  %v722 = vsub.f32 %v665, %v718
  %v723 = vsub.f32 %v669, %v718
  %v724 = vsub.f32 %v673, %v718
  %v725 = vsub.f32 %v677, %v718
  %v726 = vsub.f32 %v681, %v718
  %v727 = vsub.f32 %v685, %v718
  %v728 = vsub.f32 %v689, %v718
  %v729 = vsub.f32 %v693, %v718
  %v730 = vsub.f32 %v697, %v718
  %v731 = vsub.f32 %v701, %v718
  %v732 = vsub.f32 %v705, %v718
  %v733 = vsub.f32 %v709, %v718
  %v734 = vsub.f32 %v713, %v718
  %v735 = vmul.f32 %v719, %v719
  %v736 = vmul.f32 %v720, %v720
  %v737 = vmul.f32 %v721, %v721
  %v738 = vmul.f32 %v722, %v722
  %v739 = vmul.f32 %v723, %v723
  %v740 = vmul.f32 %v724, %v724
  %v741 = vmul.f32 %v725, %v725
  %v742 = vmul.f32 %v726, %v726
  %v743 = vmul.f32 %v727, %v727
  %v744 = vmul.f32 %v728, %v728
  %v745 = vmul.f32 %v729, %v729
  %v746 = vmul.f32 %v730, %v730
  %v747 = vmul.f32 %v731, %v731
  %v748 = vmul.f32 %v732, %v732
  %v749 = vmul.f32 %v733, %v733
  %v750 = vmul.f32 %v734, %v734
  %v751 = vadd.f32 %v635, %v735
  %v752 = vadd.f32 %v636, %v736
  %v753 = vadd.f32 %v637, %v737
  %v754 = vadd.f32 %v638, %v738
  %v755 = vadd.f32 %v639, %v739
  %v756 = vadd.f32 %v640, %v740
  %v757 = vadd.f32 %v641, %v741
  %v758 = vadd.f32 %v642, %v742
  %v759 = vadd.f32 %v643, %v743
  %v760 = vadd.f32 %v644, %v744
  %v761 = vadd.f32 %v645, %v745
  %v762 = vadd.f32 %v646, %v746
  %v763 = vadd.f32 %v647, %v747
  %v764 = vadd.f32 %v648, %v748
  %v765 = vadd.f32 %v649, %v749
  %v766 = vadd.f32 %v650, %v750
  %767 = vset.pattern.permute.xlu0 2
  %768 = vperm.xlu0 %767, %v518
  %v769 = vpop.permute.xlu0 %768
  %771 = vset.pattern.permute.xlu0 2
  %772 = vperm.xlu0 %771, %v519
  %v773 = vpop.permute.xlu0 %772
  %775 = vset.pattern.permute.xlu0 2
  %776 = vperm.xlu0 %775, %v520
  %v777 = vpop.permute.xlu0 %776
  %779 = vset.pattern.permute.xlu0 2
  %780 = vperm.xlu0 %779, %v521
  %v781 = vpop.permute.xlu0 %780
  %783 = vset.pattern.permute.xlu0 2
  %784 = vperm.xlu0 %783, %v522
  %v785 = vpop.permute.xlu0 %784
  %787 = vset.pattern.permute.xlu0 2
  %788 = vperm.xlu0 %787, %v523
  %v789 = vpop.permute.xlu0 %788
  %791 = vset.pattern.permute.xlu0 2
  %792 = vperm.xlu0 %791, %v524
  %v793 = vpop.permute.xlu0 %792
  %795 = vset.pattern.permute.xlu0 2
  %796 = vperm.xlu0 %795, %v525
  %v797 = vpop.permute.xlu0 %796
  %799 = vset.pattern.permute.xlu0 2
  %800 = vperm.xlu0 %799, %v526
  %v801 = vpop.permute.xlu0 %800
  %803 = vset.pattern.permute.xlu0 2
  %804 = vperm.xlu0 %803, %v527
  %v805 = vpop.permute.xlu0 %804
  %807 = vset.pattern.permute.xlu0 2
  %808 = vperm.xlu0 %807, %v528
  %v809 = vpop.permute.xlu0 %808
  %811 = vset.pattern.permute.xlu0 2
  %812 = vperm.xlu0 %811, %v529
  %v813 = vpop.permute.xlu0 %812
  %815 = vset.pattern.permute.xlu0 2
  %816 = vperm.xlu0 %815, %v530
  %v817 = vpop.permute.xlu0 %816
  %819 = vset.pattern.permute.xlu0 2
  %820 = vperm.xlu0 %819, %v531
  %v821 = vpop.permute.xlu0 %820
  %823 = vset.pattern.permute.xlu0 2
  %824 = vperm.xlu0 %823, %v532
  %v825 = vpop.permute.xlu0 %824
  %827 = vset.pattern.permute.xlu0 2
  %828 = vperm.xlu0 %827, %v533
  %v829 = vpop.permute.xlu0 %828
  %v831 = vlaneseq
  %v832 = vshrl.u32 %v831, 7
  %v833 = vsub.s32 2, %v832
  %v834 = vrot.slane %v534, %v833
  %v835 = vsub.f32 %v769, %v834
  %v836 = vsub.f32 %v773, %v834
  %v837 = vsub.f32 %v777, %v834
  %v838 = vsub.f32 %v781, %v834
  %v839 = vsub.f32 %v785, %v834
  %v840 = vsub.f32 %v789, %v834
  %v841 = vsub.f32 %v793, %v834
  %v842 = vsub.f32 %v797, %v834
  %v843 = vsub.f32 %v801, %v834
  %v844 = vsub.f32 %v805, %v834
  %v845 = vsub.f32 %v809, %v834
  %v846 = vsub.f32 %v813, %v834
  %v847 = vsub.f32 %v817, %v834
  %v848 = vsub.f32 %v821, %v834
  %v849 = vsub.f32 %v825, %v834
  %v850 = vsub.f32 %v829, %v834
  %v851 = vmul.f32 %v835, %v835
  %v852 = vmul.f32 %v836, %v836
  %v853 = vmul.f32 %v837, %v837
  %v854 = vmul.f32 %v838, %v838
  %v855 = vmul.f32 %v839, %v839
  %v856 = vmul.f32 %v840, %v840
  %v857 = vmul.f32 %v841, %v841
  %v858 = vmul.f32 %v842, %v842
  %v859 = vmul.f32 %v843, %v843
  %v860 = vmul.f32 %v844, %v844
  %v861 = vmul.f32 %v845, %v845
  %v862 = vmul.f32 %v846, %v846
  %v863 = vmul.f32 %v847, %v847
  %v864 = vmul.f32 %v848, %v848
  %v865 = vmul.f32 %v849, %v849
  %v866 = vmul.f32 %v850, %v850
  %v867 = vadd.f32 %v751, %v851
  %v868 = vadd.f32 %v752, %v852
  %v869 = vadd.f32 %v753, %v853
  %v870 = vadd.f32 %v754, %v854
  %v871 = vadd.f32 %v755, %v855
  %v872 = vadd.f32 %v756, %v856
  %v873 = vadd.f32 %v757, %v857
  %v874 = vadd.f32 %v758, %v858
  %v875 = vadd.f32 %v759, %v859
  %v876 = vadd.f32 %v760, %v860
  %v877 = vadd.f32 %v761, %v861
  %v878 = vadd.f32 %v762, %v862
  %v879 = vadd.f32 %v763, %v863
  %v880 = vadd.f32 %v764, %v864
  %v881 = vadd.f32 %v765, %v865
  %v882 = vadd.f32 %v766, %v866
  %v883 = vrsqrt.pop %v867
  %v884 = vmul.f32 %v867, %v883
  %vm885 = vcmp.eq.f32.partialorder %v867, inf
  %v886 = vsel %vm885, %v867, %v884
  %vm887 = vcmp.eq.f32.partialorder %v867, 0.0
  %v888 = vand.u32 %v867, 2147483648
  %v889 = vsel %vm887, %v888, %v886
  %v890 = vrsqrt.pop %v868
  %v891 = vmul.f32 %v868, %v890
  %vm892 = vcmp.eq.f32.partialorder %v868, inf
  %v893 = vsel %vm892, %v868, %v891
  %vm894 = vcmp.eq.f32.partialorder %v868, 0.0
  %v895 = vand.u32 %v868, 2147483648
  %v896 = vsel %vm894, %v895, %v893
  %v897 = vrsqrt.pop %v869
  %v898 = vmul.f32 %v869, %v897
  %vm899 = vcmp.eq.f32.partialorder %v869, inf
  %v900 = vsel %vm899, %v869, %v898
  %vm901 = vcmp.eq.f32.partialorder %v869, 0.0
  %v902 = vand.u32 %v869, 2147483648
  %v903 = vsel %vm901, %v902, %v900
  %v904 = vrsqrt.pop %v870
  %v905 = vmul.f32 %v870, %v904
  %vm906 = vcmp.eq.f32.partialorder %v870, inf
  %v907 = vsel %vm906, %v870, %v905
  %vm908 = vcmp.eq.f32.partialorder %v870, 0.0
  %v909 = vand.u32 %v870, 2147483648
  %v910 = vsel %vm908, %v909, %v907
  %v911 = vrsqrt.pop %v871
  %v912 = vmul.f32 %v871, %v911
  %vm913 = vcmp.eq.f32.partialorder %v871, inf
  %v914 = vsel %vm913, %v871, %v912
  %vm915 = vcmp.eq.f32.partialorder %v871, 0.0
  %v916 = vand.u32 %v871, 2147483648
  %v917 = vsel %vm915, %v916, %v914
  %v918 = vrsqrt.pop %v872
  %v919 = vmul.f32 %v872, %v918
  %vm920 = vcmp.eq.f32.partialorder %v872, inf
  %v921 = vsel %vm920, %v872, %v919
  %vm922 = vcmp.eq.f32.partialorder %v872, 0.0
  %v923 = vand.u32 %v872, 2147483648
  %v924 = vsel %vm922, %v923, %v921
  %v925 = vrsqrt.pop %v873
  %v926 = vmul.f32 %v873, %v925
  %vm927 = vcmp.eq.f32.partialorder %v873, inf
  %v928 = vsel %vm927, %v873, %v926
  %vm929 = vcmp.eq.f32.partialorder %v873, 0.0
  %v930 = vand.u32 %v873, 2147483648
  %v931 = vsel %vm929, %v930, %v928
  %v932 = vrsqrt.pop %v874
  %v933 = vmul.f32 %v874, %v932
  %vm934 = vcmp.eq.f32.partialorder %v874, inf
  %v935 = vsel %vm934, %v874, %v933
  %vm936 = vcmp.eq.f32.partialorder %v874, 0.0
  %v937 = vand.u32 %v874, 2147483648
  %v938 = vsel %vm936, %v937, %v935
  %v939 = vrsqrt.pop %v875
  %v940 = vmul.f32 %v875, %v939
  %vm941 = vcmp.eq.f32.partialorder %v875, inf
  %v942 = vsel %vm941, %v875, %v940
  %vm943 = vcmp.eq.f32.partialorder %v875, 0.0
  %v944 = vand.u32 %v875, 2147483648
  %v945 = vsel %vm943, %v944, %v942
  %v946 = vrsqrt.pop %v876
  %v947 = vmul.f32 %v876, %v946
  %vm948 = vcmp.eq.f32.partialorder %v876, inf
  %v949 = vsel %vm948, %v876, %v947
  %vm950 = vcmp.eq.f32.partialorder %v876, 0.0
  %v951 = vand.u32 %v876, 2147483648
  %v952 = vsel %vm950, %v951, %v949
  %v953 = vrsqrt.pop %v877
  %v954 = vmul.f32 %v877, %v953
  %vm955 = vcmp.eq.f32.partialorder %v877, inf
  %v956 = vsel %vm955, %v877, %v954
  %vm957 = vcmp.eq.f32.partialorder %v877, 0.0
  %v958 = vand.u32 %v877, 2147483648
  %v959 = vsel %vm957, %v958, %v956
  %v960 = vrsqrt.pop %v878
  %v961 = vmul.f32 %v878, %v960
  %vm962 = vcmp.eq.f32.partialorder %v878, inf
  %v963 = vsel %vm962, %v878, %v961
  %vm964 = vcmp.eq.f32.partialorder %v878, 0.0
  %v965 = vand.u32 %v878, 2147483648
  %v966 = vsel %vm964, %v965, %v963
  %v967 = vrsqrt.pop %v879
  %v968 = vmul.f32 %v879, %v967
  %vm969 = vcmp.eq.f32.partialorder %v879, inf
  %v970 = vsel %vm969, %v879, %v968
  %vm971 = vcmp.eq.f32.partialorder %v879, 0.0
  %v972 = vand.u32 %v879, 2147483648
  %v973 = vsel %vm971, %v972, %v970
  %v974 = vrsqrt.pop %v880
  %v975 = vmul.f32 %v880, %v974
  %vm976 = vcmp.eq.f32.partialorder %v880, inf
  %v977 = vsel %vm976, %v880, %v975
  %vm978 = vcmp.eq.f32.partialorder %v880, 0.0
  %v979 = vand.u32 %v880, 2147483648
  %v980 = vsel %vm978, %v979, %v977
  %v981 = vrsqrt.pop %v881
  %v982 = vmul.f32 %v881, %v981
  %vm983 = vcmp.eq.f32.partialorder %v881, inf
  %v984 = vsel %vm983, %v881, %v982
  %vm985 = vcmp.eq.f32.partialorder %v881, 0.0
  %v986 = vand.u32 %v881, 2147483648
  %v987 = vsel %vm985, %v986, %v984
  %v988 = vrsqrt.pop %v882
  %v989 = vmul.f32 %v882, %v988
  %vm990 = vcmp.eq.f32.partialorder %v882, inf
  %v991 = vsel %vm990, %v882, %v989
  %vm992 = vcmp.eq.f32.partialorder %v882, 0.0
  %v993 = vand.u32 %v882, 2147483648
  %v994 = vsel %vm992, %v993, %v991
  %v995 = vsub.f32 %v412, %v889
  %v996 = vsub.f32 %v419, %v896
  %v997 = vsub.f32 %v426, %v903
  %v998 = vsub.f32 %v433, %v910
  %v999 = vsub.f32 %v440, %v917
  %v1000 = vsub.f32 %v447, %v924
  %v1001 = vsub.f32 %v454, %v931
  %v1002 = vsub.f32 %v461, %v938
  %v1003 = vsub.f32 %v468, %v945
  %v1004 = vsub.f32 %v475, %v952
  %v1005 = vsub.f32 %v482, %v959
  %v1006 = vsub.f32 %v489, %v966
  %v1007 = vsub.f32 %v496, %v973
  %v1008 = vsub.f32 %v503, %v980
  %v1009 = vsub.f32 %v510, %v987
  %v1010 = vsub.f32 %v517, %v994
  %v1011 = vand.u32 2147483647, %v995
  %v1012 = vand.u32 2147483647, %v996
  %v1013 = vand.u32 2147483647, %v997
  %v1014 = vand.u32 2147483647, %v998
  %v1015 = vand.u32 2147483647, %v999
  %v1016 = vand.u32 2147483647, %v1000
  %v1017 = vand.u32 2147483647, %v1001
  %v1018 = vand.u32 2147483647, %v1002
  %v1019 = vand.u32 2147483647, %v1003
  %v1020 = vand.u32 2147483647, %v1004
  %v1021 = vand.u32 2147483647, %v1005
  %v1022 = vand.u32 2147483647, %v1006
  %v1023 = vand.u32 2147483647, %v1007
  %v1024 = vand.u32 2147483647, %v1008
  %v1025 = vand.u32 2147483647, %v1009
  %v1026 = vand.u32 2147483647, %v1010
  %vm1027 = vcmp.lt.f32.partialorder %v1011, 0.05
  %vm1028 = vcmp.lt.f32.partialorder %v1012, 0.05
  %vm1029 = vcmp.lt.f32.partialorder %v1013, 0.05
  %vm1030 = vcmp.lt.f32.partialorder %v1014, 0.05
  %vm1031 = vcmp.lt.f32.partialorder %v1015, 0.05
  %vm1032 = vcmp.lt.f32.partialorder %v1016, 0.05
  %vm1033 = vcmp.lt.f32.partialorder %v1017, 0.05
  %vm1034 = vcmp.lt.f32.partialorder %v1018, 0.05
  %vm1035 = vcmp.lt.f32.partialorder %v1019, 0.05
  %vm1036 = vcmp.lt.f32.partialorder %v1020, 0.05
  %vm1037 = vcmp.lt.f32.partialorder %v1021, 0.05
  %vm1038 = vcmp.lt.f32.partialorder %v1022, 0.05
  %vm1039 = vcmp.lt.f32.partialorder %v1023, 0.05
  %vm1040 = vcmp.lt.f32.partialorder %v1024, 0.05
  %vm1041 = vcmp.lt.f32.partialorder %v1025, 0.05
  %vm1042 = vcmp.lt.f32.partialorder %v1026, 0.05
  %v1043 = vld [vmem:[%s4] sm:$0x1]
  %v1045 = vlaneseq
  %v1046 = vshrl.u32 %v1045, 7
  %v1047 = vsub.s32 0, %v1046
  %v1048 = vrot.slane %v1043, %v1047
  %v1050 = vsel %vm1027, %v1048, 0.0
  %v1051 = vsel %vm1028, %v1048, 0.0
  %v1052 = vsel %vm1029, %v1048, 0.0
  %v1053 = vsel %vm1030, %v1048, 0.0
  %v1054 = vsel %vm1031, %v1048, 0.0
  %v1055 = vsel %vm1032, %v1048, 0.0
  %v1056 = vsel %vm1033, %v1048, 0.0
  %v1057 = vsel %vm1034, %v1048, 0.0
  %v1058 = vsel %vm1035, %v1048, 0.0
  %v1059 = vsel %vm1036, %v1048, 0.0
  %v1060 = vsel %vm1037, %v1048, 0.0
  %v1061 = vsel %vm1038, %v1048, 0.0
  %v1062 = vsel %vm1039, %v1048, 0.0
  %v1063 = vsel %vm1040, %v1048, 0.0
  %v1064 = vsel %vm1041, %v1048, 0.0
  %v1065 = vsel %vm1042, %v1048, 0.0
  %v1066 = vld [vmem:[%s5] sm:$0xff]
  %v1067 = vld [vmem:[%s5 + $0x8] sm:$0xff]
  %v1068 = vld [vmem:[%s5 + $0x10] sm:$0xff]
  %v1069 = vld [vmem:[%s5 + $0x18] sm:$0xff]
  %v1070 = vld [vmem:[%s5 + $0x20] sm:$0xff]
  %v1071 = vld [vmem:[%s5 + $0x28] sm:$0xff]
  %v1072 = vld [vmem:[%s5 + $0x30] sm:$0xff]
  %v1073 = vld [vmem:[%s5 + $0x38] sm:$0xff]
  %v1074 = vld [vmem:[%s5 + $0x40] sm:$0xff]
  %v1075 = vld [vmem:[%s5 + $0x48] sm:$0xff]
  %v1076 = vld [vmem:[%s5 + $0x50] sm:$0xff]
  %v1077 = vld [vmem:[%s5 + $0x58] sm:$0xff]
  %v1078 = vld [vmem:[%s5 + $0x60] sm:$0xff]
  %v1079 = vld [vmem:[%s5 + $0x68] sm:$0xff]
  %v1080 = vld [vmem:[%s5 + $0x70] sm:$0xff]
  %v1081 = vld [vmem:[%s5 + $0x78] sm:$0xff]
  %1082 = vadd.xlane.f32.xlu0 %v1050
  %v1083 = vpop.xlane.xlu0 %1082
  %1084 = vadd.xlane.f32.xlu0 %v1051
  %v1085 = vpop.xlane.xlu0 %1084
  %1086 = vadd.xlane.f32.xlu0 %v1052
  %v1087 = vpop.xlane.xlu0 %1086
  %1088 = vadd.xlane.f32.xlu0 %v1053
  %v1089 = vpop.xlane.xlu0 %1088
  %1090 = vadd.xlane.f32.xlu0 %v1054
  %v1091 = vpop.xlane.xlu0 %1090
  %1092 = vadd.xlane.f32.xlu0 %v1055
  %v1093 = vpop.xlane.xlu0 %1092
  %1094 = vadd.xlane.f32.xlu0 %v1056
  %v1095 = vpop.xlane.xlu0 %1094
  %1096 = vadd.xlane.f32.xlu0 %v1057
  %v1097 = vpop.xlane.xlu0 %1096
  %1098 = vadd.xlane.f32.xlu0 %v1058
  %v1099 = vpop.xlane.xlu0 %1098
  %1100 = vadd.xlane.f32.xlu0 %v1059
  %v1101 = vpop.xlane.xlu0 %1100
  %1102 = vadd.xlane.f32.xlu0 %v1060
  %v1103 = vpop.xlane.xlu0 %1102
  %1104 = vadd.xlane.f32.xlu0 %v1061
  %v1105 = vpop.xlane.xlu0 %1104
  %1106 = vadd.xlane.f32.xlu0 %v1062
  %v1107 = vpop.xlane.xlu0 %1106
  %1108 = vadd.xlane.f32.xlu0 %v1063
  %v1109 = vpop.xlane.xlu0 %1108
  %1110 = vadd.xlane.f32.xlu0 %v1064
  %v1111 = vpop.xlane.xlu0 %1110
  %1112 = vadd.xlane.f32.xlu0 %v1065
  %v1113 = vpop.xlane.xlu0 %1112
  %v1114 = vadd.f32 %v1066, %v1083
  %v1115 = vadd.f32 %v1067, %v1085
  %v1116 = vadd.f32 %v1068, %v1087
  %v1117 = vadd.f32 %v1069, %v1089
  %v1118 = vadd.f32 %v1070, %v1091
  %v1119 = vadd.f32 %v1071, %v1093
  %v1120 = vadd.f32 %v1072, %v1095
  %v1121 = vadd.f32 %v1073, %v1097
  %v1122 = vadd.f32 %v1074, %v1099
  %v1123 = vadd.f32 %v1075, %v1101
  %v1124 = vadd.f32 %v1076, %v1103
  %v1125 = vadd.f32 %v1077, %v1105
  %v1126 = vadd.f32 %v1078, %v1107
  %v1127 = vadd.f32 %v1079, %v1109
  %v1128 = vadd.f32 %v1080, %v1111
  %v1129 = vadd.f32 %v1081, %v1113
  %vm1130 = vcmask 7168
  %1131 = vst.msk [vmem:[%s5] sm:$0xff] %vm1130, %v1114
  %1132 = vst.msk [vmem:[%s5 + $0x8] sm:$0xff] %vm1130, %v1115
  %1133 = vst.msk [vmem:[%s5 + $0x10] sm:$0xff] %vm1130, %v1116
  %1134 = vst.msk [vmem:[%s5 + $0x18] sm:$0xff] %vm1130, %v1117
  %1135 = vst.msk [vmem:[%s5 + $0x20] sm:$0xff] %vm1130, %v1118
  %1136 = vst.msk [vmem:[%s5 + $0x28] sm:$0xff] %vm1130, %v1119
  %1137 = vst.msk [vmem:[%s5 + $0x30] sm:$0xff] %vm1130, %v1120
  %1138 = vst.msk [vmem:[%s5 + $0x38] sm:$0xff] %vm1130, %v1121
  %1139 = vst.msk [vmem:[%s5 + $0x40] sm:$0xff] %vm1130, %v1122
  %1140 = vst.msk [vmem:[%s5 + $0x48] sm:$0xff] %vm1130, %v1123
  %1141 = vst.msk [vmem:[%s5 + $0x50] sm:$0xff] %vm1130, %v1124
  %1142 = vst.msk [vmem:[%s5 + $0x58] sm:$0xff] %vm1130, %v1125
  %1143 = vst.msk [vmem:[%s5 + $0x60] sm:$0xff] %vm1130, %v1126
  %1144 = vst.msk [vmem:[%s5 + $0x68] sm:$0xff] %vm1130, %v1127
  %1145 = vst.msk [vmem:[%s5 + $0x70] sm:$0xff] %vm1130, %v1128
  %1146 = vst.msk [vmem:[%s5 + $0x78] sm:$0xff] %vm1130, %v1129
  // Predicated region
  $region26: #{tpu_custom_call.1} parent=0 // pred_check
    _
  $region27: #{tpu_custom_call.1} parent=0 // pred_check_branch
    %1148 = sbr.rel (0) target = $region29
  $region28: #{tpu_custom_call.1} parent=0 // pred_region
    _
  $region29: #{tpu_custom_call.1} parent=0 // pred_fallthru
    _
  // Predicated region
  $region30: #{tpu_custom_call.1} parent=0 // pred_check
    _
  $region31: #{tpu_custom_call.1} parent=0 // pred_check_branch
    %1150 = sbr.rel (0) target = $region33
  $region32: #{tpu_custom_call.1} parent=0 // pred_region
    _
  $region33: #{tpu_custom_call.1} parent=0 // pred_fallthru
    _

</llo_original>
